<compile_context>
chip_gen: v5e
topology: v5e:2x2
jax: 0.10.0
libtpu: 0.0.40
codegen_flags: <defaults>
</compile_context>

<pallas_src>
import jax
import jax.numpy as jnp
from jax.experimental import pallas as pl
from jax.experimental.pallas import tpu as pltpu


def qnet_kernel(obs_ref,              # (A, B, D)
                w1_ref, b1_ref,       # (A, D, H1), (A, 1, H1)
                w2_ref, b2_ref,       # (A, H1, H2), (A, 1, H2)
                w3_ref, b3_ref,       # (A, H2, NA), (A, 1, NA)
                mask_ref,             # (A, 1, NA) float32, 1.0 => invalid action
                out_ref):             # (A, B, NA)
    x = obs_ref[...]                                                  # (A, B, D)

    h1 = jnp.einsum('abd,adh->abh', x, w1_ref[...],
                    preferred_element_type=jnp.float32) + b1_ref[...]
    h1 = jnp.maximum(h1, 0.0)                                         # (A, B, H1)

    h2 = jnp.einsum('abh,ahk->abk', h1, w2_ref[...],
                    preferred_element_type=jnp.float32) + b2_ref[...]
    h2 = jnp.maximum(h2, 0.0)                                         # (A, B, H2)

    q = jnp.einsum('abk,akn->abn', h2, w3_ref[...],
                   preferred_element_type=jnp.float32) + b3_ref[...]  # (A, B, NA)

    # mask invalid actions: q[:, n_valid:] = -999
    out_ref[...] = jnp.where(mask_ref[...] > 0.0, jnp.float32(-999.0), q)


def multi_agent_qnet(obs, params, n_valid):
    """obs: (B, A, D) float32 ; n_valid: (A,) int32 ; returns (B, A, n_actions)."""
    w1, b1, w2, b2, w3, b3 = params
    B, A, D = obs.shape
    NA = w3.shape[-1]

    obs_a = jnp.transpose(obs, (1, 0, 2))                     # (A, B, D)

    # Precompute the invalid-action mask in the wrapper (replaces scalar
    # prefetch + in-kernel iota): 1.0 where action index >= n_valid[a].
    ids = jnp.arange(NA, dtype=jnp.int32)[None, None, :]      # (1, 1, NA)
    mask = (ids >= n_valid[:, None, None]).astype(jnp.float32)  # (A, 1, NA)

    vmem_specs = [pl.BlockSpec(memory_space=pltpu.MemorySpace.VMEM)
                  for _ in range(8)]

    out = pl.pallas_call(
        qnet_kernel,
        out_shape=jax.ShapeDtypeStruct((A, B, NA), jnp.float32),
        in_specs=vmem_specs,
        out_specs=pl.BlockSpec(memory_space=pltpu.MemorySpace.VMEM),
    )(obs_a, w1, b1, w2, b2, w3, b3, mask)

    return jnp.transpose(out, (1, 0, 2))                      # (B, A, NA)


def init_params(key, n_agents, input_shape, n_actions, h1=64, h2=32):
    """Deterministic synthetic parameters. Weights stored (in, out) per agent."""
    ks = jax.random.split(key, 6)
    scale = 0.1
    w1 = scale * jax.random.normal(ks[0], (n_agents, input_shape, h1), jnp.float32)
    b1 = scale * jax.random.normal(ks[1], (n_agents, 1, h1), jnp.float32)
    w2 = scale * jax.random.normal(ks[2], (n_agents, h1, h2), jnp.float32)
    b2 = scale * jax.random.normal(ks[3], (n_agents, 1, h2), jnp.float32)
    w3 = scale * jax.random.normal(ks[4], (n_agents, h2, n_actions), jnp.float32)
    b3 = scale * jax.random.normal(ks[5], (n_agents, 1, n_actions), jnp.float32)
    return (w1, b1, w2, b2, w3, b3)


def reference_forward(obs, params, n_valid):
    """Plain-JAX reference (mirrors the PyTorch loop)."""
    w1, b1, w2, b2, w3, b3 = params
    B, A, D = obs.shape
    NA = w3.shape[-1]
    outs = []
    for i in range(A):
        x = obs[:, i, :]
        h = jnp.maximum(x @ w1[i] + b1[i, 0], 0.0)
        h = jnp.maximum(h @ w2[i] + b2[i, 0], 0.0)
        q = h @ w3[i] + b3[i, 0]
        ids = jnp.arange(NA)
        q = jnp.where(ids[None, :] >= n_valid[i], -999.0, q)
        outs.append(q[:, None, :])
    return jnp.concatenate(outs, axis=1)


if __name__ == "__main__":
    key = jax.random.PRNGKey(0)
    B, A, D, NA = 8, 3, 16, 8          # batch, n_agents, input_shape, n_actions
    n_valid = jnp.array([5, 8, 3], dtype=jnp.int32)

    k_obs, k_par = jax.random.split(key)
    obs = jax.random.normal(k_obs, (B, A, D), jnp.float32)
    params = init_params(k_par, A, D, NA)

    out = multi_agent_qnet(obs, params, n_valid)
    out = jax.block_until_ready(out)

    ref = reference_forward(obs, params, n_valid)
    assert out.shape == (B, A, NA)
    assert jnp.allclose(out, ref, atol=1e-5, rtol=1e-5)

    print("KERNEL_OK")
</pallas_src>

<mosaic_0001>
module attributes {stable_mosaic.version = 11 : i64} {
  func.func @qnet_kernel(%arg0: memref<3x8x16xf32, #tpu.memory_space<vmem>>, %arg1: memref<3x16x64xf32, #tpu.memory_space<vmem>>, %arg2: memref<3x1x64xf32, #tpu.memory_space<vmem>>, %arg3: memref<3x64x32xf32, #tpu.memory_space<vmem>>, %arg4: memref<3x1x32xf32, #tpu.memory_space<vmem>>, %arg5: memref<3x32x8xf32, #tpu.memory_space<vmem>>, %arg6: memref<3x1x8xf32, #tpu.memory_space<vmem>>, %arg7: memref<3x1x8xf32, #tpu.memory_space<vmem>>, %arg8: memref<3x8x8xf32, #tpu.memory_space<vmem>>) attributes {dimension_semantics = [], scalar_prefetch = 0 : i64, scratch_operands = 0 : i64, tpu.core_type = #tpu.core_type<tc>} {
    %c0 = arith.constant 0 : index
    %c0_0 = arith.constant 0 : index
    %c0_1 = arith.constant 0 : index
    %0 = vector.load %arg0[%c0, %c0_0, %c0_1] : memref<3x8x16xf32, #tpu.memory_space<vmem>>, vector<3x8x16xf32>
    %c0_2 = arith.constant 0 : index
    %c0_3 = arith.constant 0 : index
    %c0_4 = arith.constant 0 : index
    %1 = vector.load %arg1[%c0_2, %c0_3, %c0_4] : memref<3x16x64xf32, #tpu.memory_space<vmem>>, vector<3x16x64xf32>
    "tpu.trace_start"() <{level = 10 : i32, message = "abd,adh->abh"}> : () -> ()
    %cst = arith.constant dense<0.000000e+00> : vector<3x8x64xf32>
    %2 = tpu.matmul %0, %1, %cst {dimension_numbers = #tpu.dot_dimension_numbers<[2], [1], [1], [2], [0, 0, 0, 1, 1, 2], [0], [0]>} : vector<3x8x16xf32>, vector<3x16x64xf32>, vector<3x8x64xf32> -> vector<3x8x64xf32>
    "tpu.trace_stop"() : () -> ()
    %c0_5 = arith.constant 0 : index
    %c0_6 = arith.constant 0 : index
    %c0_7 = arith.constant 0 : index
    %3 = vector.load %arg2[%c0_5, %c0_6, %c0_7] : memref<3x1x64xf32, #tpu.memory_space<vmem>>, vector<3x1x64xf32>
    %4 = vector.broadcast %3 : vector<3x1x64xf32> to vector<3x8x64xf32>
    %5 = arith.addf %2, %4 : vector<3x8x64xf32>
    %cst_8 = arith.constant 0.000000e+00 : f32
    %6 = vector.broadcast %cst_8 : f32 to vector<3x8x64xf32>
    %7 = arith.maximumf %5, %6 : vector<3x8x64xf32>
    %c0_9 = arith.constant 0 : index
    %c0_10 = arith.constant 0 : index
    %c0_11 = arith.constant 0 : index
    %8 = vector.load %arg3[%c0_9, %c0_10, %c0_11] : memref<3x64x32xf32, #tpu.memory_space<vmem>>, vector<3x64x32xf32>
    "tpu.trace_start"() <{level = 10 : i32, message = "abh,ahk->abk"}> : () -> ()
    %cst_12 = arith.constant dense<0.000000e+00> : vector<3x8x32xf32>
    %9 = tpu.matmul %7, %8, %cst_12 {dimension_numbers = #tpu.dot_dimension_numbers<[2], [1], [1], [2], [0, 0, 0, 1, 1, 2], [0], [0]>} : vector<3x8x64xf32>, vector<3x64x32xf32>, vector<3x8x32xf32> -> vector<3x8x32xf32>
    "tpu.trace_stop"() : () -> ()
    %c0_13 = arith.constant 0 : index
    %c0_14 = arith.constant 0 : index
    %c0_15 = arith.constant 0 : index
    %10 = vector.load %arg4[%c0_13, %c0_14, %c0_15] : memref<3x1x32xf32, #tpu.memory_space<vmem>>, vector<3x1x32xf32>
    %11 = vector.broadcast %10 : vector<3x1x32xf32> to vector<3x8x32xf32>
    %12 = arith.addf %9, %11 : vector<3x8x32xf32>
    %cst_16 = arith.constant 0.000000e+00 : f32
    %13 = vector.broadcast %cst_16 : f32 to vector<3x8x32xf32>
    %14 = arith.maximumf %12, %13 : vector<3x8x32xf32>
    %c0_17 = arith.constant 0 : index
    %c0_18 = arith.constant 0 : index
    %c0_19 = arith.constant 0 : index
    %15 = vector.load %arg5[%c0_17, %c0_18, %c0_19] : memref<3x32x8xf32, #tpu.memory_space<vmem>>, vector<3x32x8xf32>
    "tpu.trace_start"() <{level = 10 : i32, message = "abk,akn->abn"}> : () -> ()
    %cst_20 = arith.constant dense<0.000000e+00> : vector<3x8x8xf32>
    %16 = tpu.matmul %14, %15, %cst_20 {dimension_numbers = #tpu.dot_dimension_numbers<[2], [1], [1], [2], [0, 0, 0, 1, 1, 2], [0], [0]>} : vector<3x8x32xf32>, vector<3x32x8xf32>, vector<3x8x8xf32> -> vector<3x8x8xf32>
    "tpu.trace_stop"() : () -> ()
    %c0_21 = arith.constant 0 : index
    %c0_22 = arith.constant 0 : index
    %c0_23 = arith.constant 0 : index
    %17 = vector.load %arg6[%c0_21, %c0_22, %c0_23] : memref<3x1x8xf32, #tpu.memory_space<vmem>>, vector<3x1x8xf32>
    %18 = vector.broadcast %17 : vector<3x1x8xf32> to vector<3x8x8xf32>
    %19 = arith.addf %16, %18 : vector<3x8x8xf32>
    %c0_24 = arith.constant 0 : index
    %c0_25 = arith.constant 0 : index
    %c0_26 = arith.constant 0 : index
    %20 = vector.load %arg7[%c0_24, %c0_25, %c0_26] : memref<3x1x8xf32, #tpu.memory_space<vmem>>, vector<3x1x8xf32>
    %cst_27 = arith.constant 0.000000e+00 : f32
    %21 = vector.broadcast %cst_27 : f32 to vector<3x1x8xf32>
    %22 = arith.cmpf ogt, %20, %21 : vector<3x1x8xf32>
    %cst_28 = arith.constant -9.990000e+02 : f32
    %23 = vector.shape_cast %22 : vector<3x1x8xi1> to vector<3x1x8xi1>
    %24 = vector.broadcast %23 : vector<3x1x8xi1> to vector<3x8x8xi1>
    %25 = vector.broadcast %cst_28 : f32 to vector<3x8x8xf32>
    %26 = arith.select %24, %25, %19 : vector<3x8x8xi1>, vector<3x8x8xf32>
    %c0_29 = arith.constant 0 : index
    %c0_30 = arith.constant 0 : index
    %c0_31 = arith.constant 0 : index
    %27 = vector.load %arg8[%c0_29, %c0_30, %c0_31] : memref<3x8x8xf32, #tpu.memory_space<vmem>>, vector<3x8x8xf32>
    tpu.vector_store %arg8[%c0_29, %c0_30, %c0_31], %26 {strides = array<i32>} : memref<3x8x8xf32, #tpu.memory_space<vmem>>, vector<3x8x8xf32>,
    return
  }
}

</mosaic_0001>

<llo_original>
// kernel: tpu_custom_call.1
$region0: #{tpu_custom_call.1}
  #allocation0 [shape = 'u32[]', space=smem, size = 0x4, offset = 0x4, fixed_abs, tag = 'smem constant byte address 0x4 - core index']
  #allocation1 [shape = 'u32[72,128]{1,0:T(1,128)}', space=vmem, size = 0x9000, scoped, tag = 'internal scratch']
  %s0 = inlined_call_operand.vmem [shape: f32[3,8,16], index: 0, kind: input, shape index: {}]
  %s1 = inlined_call_operand.vmem [shape: f32[3,16,64], index: 1, kind: input, shape index: {}]
  %s2 = inlined_call_operand.vmem [shape: f32[3,1,64], index: 2, kind: input, shape index: {}]
  %s3 = inlined_call_operand.vmem [shape: f32[3,64,32], index: 3, kind: input, shape index: {}]
  %s4 = inlined_call_operand.vmem [shape: f32[3,1,32], index: 4, kind: input, shape index: {}]
  %s5 = inlined_call_operand.vmem [shape: f32[3,32,8], index: 5, kind: input, shape index: {}]
  %s6 = inlined_call_operand.vmem [shape: f32[3,1,8], index: 6, kind: input, shape index: {}]
  %s7 = inlined_call_operand.vmem [shape: f32[3,1,8], index: 7, kind: input, shape index: {}]
  %s8 = inlined_call_operand.hbm [shape: f32[3,8,8], index: 8, kind: output, shape index: {}]
  %s9 = sld [smem:[#allocation0]]
  $region42: #{tpu_custom_call.1} parent=0
    _
  %s11 = ssub.s32 1, %s9
  %s12 = scalar_select 0, %s11, %s9
  $region1: #{tpu_custom_call.1} parent=0
    #allocation2 [shape = 'u8[12288]{0}', space=vmem, size = 0x3000, scoped, tag = 'output window, operand 0, single buffered']
    #allocation3 [shape = 's32[1]{0}', space=sflag, size = 0x4, scoped, tag = 'scoped memory for tpu_custom_call.1']
    %13 = vsyncpa [#allocation3], 0
    // Predicated region
    $region2: #{tpu_custom_call.1} parent=1 // pred_check
      _
    $region3: #{tpu_custom_call.1} parent=1 // pred_check_branch
      %15 = sbr.rel (0) target = $region5
    $region4: #{tpu_custom_call.1} parent=1 // pred_region
      _
    $region5: #{tpu_custom_call.1} parent=1 // pred_fallthru
      _
    // Predicated region
    $region6: #{tpu_custom_call.1} parent=1 // pred_check
      _
    $region7: #{tpu_custom_call.1} parent=1 // pred_check_branch
      %17 = sbr.rel (0) target = $region9
    $region8: #{tpu_custom_call.1} parent=1 // pred_region
      _
    $region9: #{tpu_custom_call.1} parent=1 // pred_fallthru
      _
    // Predicated region
    $region10: #{tpu_custom_call.1} parent=1 // pred_check
      _
    $region11: #{tpu_custom_call.1} parent=1 // pred_check_branch
      %19 = sbr.rel (0) target = $region13
    $region12: #{tpu_custom_call.1} parent=1 // pred_region
      _
    $region13: #{tpu_custom_call.1} parent=1 // pred_fallthru
      _
    // Predicated region
    $region14: #{tpu_custom_call.1} parent=1 // pred_check
      _
    $region15: #{tpu_custom_call.1} parent=1 // pred_check_branch
      %21 = sbr.rel (0) target = $region17
    $region16: #{tpu_custom_call.1} parent=1 // pred_region
      _
    $region17: #{tpu_custom_call.1} parent=1 // pred_fallthru
      _
    // Predicated region
    $region18: #{tpu_custom_call.1} parent=1 // pred_check
      _
    $region19: #{tpu_custom_call.1} parent=1 // pred_check_branch
      %23 = sbr.rel (0) target = $region21
    $region20: #{tpu_custom_call.1} parent=1 // pred_region
      _
    $region21: #{tpu_custom_call.1} parent=1 // pred_fallthru
      _
    // Predicated region
    $region22: #{tpu_custom_call.1} parent=1 // pred_check
      _
    $region23: #{tpu_custom_call.1} parent=1 // pred_check_branch
      %25 = sbr.rel (0) target = $region25
    $region24: #{tpu_custom_call.1} parent=1 // pred_region
      _
    $region25: #{tpu_custom_call.1} parent=1 // pred_fallthru
      _
    // Predicated region
    $region26: #{tpu_custom_call.1} parent=1 // pred_check
      _
    $region27: #{tpu_custom_call.1} parent=1 // pred_check_branch
      %27 = sbr.rel (0) target = $region29
    $region28: #{tpu_custom_call.1} parent=1 // pred_region
      _
    $region29: #{tpu_custom_call.1} parent=1 // pred_fallthru
      _
    // Predicated region
    $region30: #{tpu_custom_call.1} parent=1 // pred_check
      _
    $region31: #{tpu_custom_call.1} parent=1 // pred_check_branch
      %29 = sbr.rel (0) target = $region33
    $region32: #{tpu_custom_call.1} parent=1 // pred_region
      _
    $region33: #{tpu_custom_call.1} parent=1 // pred_fallthru
      _
    %v30 = vld [vmem:[%s0] sm:$0xff]
    %v31 = vld [vmem:[%s0 + $0x8] sm:$0xff]
    %v32 = vld [vmem:[%s0 + $0x10] sm:$0xff]
    %v33 = vld [vmem:[%s1] sm:$0xff]
    %v34 = vld [vmem:[%s1 + $0x8] sm:$0xff]
    %v35 = vld [vmem:[%s1 + $0x10] sm:$0xff]
    %v36 = vld [vmem:[%s1 + $0x18] sm:$0xff]
    %v37 = vld [vmem:[%s1 + $0x20] sm:$0xff]
    %v38 = vld [vmem:[%s1 + $0x28] sm:$0xff]
    %v39 = vld [vmem:[%s2] sm:$0x1]
    %v40 = vld [vmem:[%s2 + $0x1] sm:$0x1]
    %v41 = vld [vmem:[%s2 + $0x2] sm:$0x1]
    %v45 = vperm.slane %v39, 0
    %v46 = vperm.slane %v40, 0
    %v47 = vperm.slane %v41, 0
    %vm51 = vcmask 130048
    %v53 = vsel %vm51, %v30, 0
    %55 = vmatpush.msra.mxu0 0.0
    %56 = vmatpush.msra.mxu0 0.0
    %57 = vmatpush.msra.mxu0 0.0
    %58 = vmatpush.msra.mxu0 0.0
    %59 = vmatpush.msra.mxu0 0.0
    %60 = vmatpush.msra.mxu0 0.0
    %61 = vmatpush.msra.mxu0 0.0
    %62 = vmatpush.msra.mxu0 0.0
    %63 = vmatpush.msra.mxu0 0.0
    %64 = vmatpush.msra.mxu0 0.0
    %65 = vmatpush.msra.mxu0 0.0
    %66 = vmatpush.msra.mxu0 0.0
    %67 = vmatpush.msra.mxu0 0.0
    %68 = vmatpush.msra.mxu0 0.0
    %69 = vmatpush.msra.mxu0 %v34
    %70 = vmatpush.msra.mxu0 %v33
    %71 = vmatmul.f32.gmra.mxu0 %v53
    %v72 = vpop.f32.mrf.mxu0
    %v73 = vadd.f32 %v45, %v72
    %74 = vdwg.mxu0
    %v76 = vsel %vm51, %v31, 0
    %78 = vmatpush.msra.mxu0 0.0
    %79 = vmatpush.msra.mxu0 0.0
    %80 = vmatpush.msra.mxu0 0.0
    %81 = vmatpush.msra.mxu0 0.0
    %82 = vmatpush.msra.mxu0 0.0
    %83 = vmatpush.msra.mxu0 0.0
    %84 = vmatpush.msra.mxu0 0.0
    %85 = vmatpush.msra.mxu0 0.0
    %86 = vmatpush.msra.mxu0 0.0
    %87 = vmatpush.msra.mxu0 0.0
    %88 = vmatpush.msra.mxu0 0.0
    %89 = vmatpush.msra.mxu0 0.0
    %90 = vmatpush.msra.mxu0 0.0
    %91 = vmatpush.msra.mxu0 0.0
    %92 = vmatpush.msra.mxu0 %v36
    %93 = vmatpush.msra.mxu0 %v35
    %94 = vmatmul.f32.gmra.mxu0 %v76
    %v95 = vpop.f32.mrf.mxu0
    %v96 = vadd.f32 %v46, %v95
    %97 = vdwg.mxu0
    %v99 = vsel %vm51, %v32, 0
    %101 = vmatpush.msra.mxu0 0.0
    %102 = vmatpush.msra.mxu0 0.0
    %103 = vmatpush.msra.mxu0 0.0
    %104 = vmatpush.msra.mxu0 0.0
    %105 = vmatpush.msra.mxu0 0.0
    %106 = vmatpush.msra.mxu0 0.0
    %107 = vmatpush.msra.mxu0 0.0
    %108 = vmatpush.msra.mxu0 0.0
    %109 = vmatpush.msra.mxu0 0.0
    %110 = vmatpush.msra.mxu0 0.0
    %111 = vmatpush.msra.mxu0 0.0
    %112 = vmatpush.msra.mxu0 0.0
    %113 = vmatpush.msra.mxu0 0.0
    %114 = vmatpush.msra.mxu0 0.0
    %115 = vmatpush.msra.mxu0 %v38
    %116 = vmatpush.msra.mxu0 %v37
    %117 = vmatmul.f32.gmra.mxu0 %v99
    %v118 = vpop.f32.mrf.mxu0
    %v119 = vadd.f32 %v47, %v118
    %120 = vdwg.mxu0
    %v121 = vmax.f32 %v73, 0.0
    %v122 = vmax.f32 %v96, 0.0
    %v123 = vmax.f32 %v119, 0.0
    %v124 = vld [vmem:[%s3] sm:$0xff]
    %v125 = vld [vmem:[%s3 + $0x8] sm:$0xff]
    %v126 = vld [vmem:[%s3 + $0x10] sm:$0xff]
    %v127 = vld [vmem:[%s3 + $0x18] sm:$0xff]
    %v128 = vld [vmem:[%s3 + $0x20] sm:$0xff]
    %v129 = vld [vmem:[%s3 + $0x28] sm:$0xff]
    %v130 = vld [vmem:[%s3 + $0x30] sm:$0xff]
    %v131 = vld [vmem:[%s3 + $0x38] sm:$0xff]
    %v132 = vld [vmem:[%s3 + $0x40] sm:$0xff]
    %v133 = vld [vmem:[%s3 + $0x48] sm:$0xff]
    %v134 = vld [vmem:[%s3 + $0x50] sm:$0xff]
    %v135 = vld [vmem:[%s3 + $0x58] sm:$0xff]
    %v136 = vld [vmem:[%s3 + $0x60] sm:$0xff]
    %v137 = vld [vmem:[%s3 + $0x68] sm:$0xff]
    %v138 = vld [vmem:[%s3 + $0x70] sm:$0xff]
    %v139 = vld [vmem:[%s3 + $0x78] sm:$0xff]
    %v140 = vld [vmem:[%s3 + $0x80] sm:$0xff]
    %v141 = vld [vmem:[%s3 + $0x88] sm:$0xff]
    %v142 = vld [vmem:[%s3 + $0x90] sm:$0xff]
    %v143 = vld [vmem:[%s3 + $0x98] sm:$0xff]
    %v144 = vld [vmem:[%s3 + $0xa0] sm:$0xff]
    %v145 = vld [vmem:[%s3 + $0xa8] sm:$0xff]
    %v146 = vld [vmem:[%s3 + $0xb0] sm:$0xff]
    %v147 = vld [vmem:[%s3 + $0xb8] sm:$0xff]
    %v148 = vld [vmem:[%s4] sm:$0x1]
    %v149 = vld [vmem:[%s4 + $0x1] sm:$0x1]
    %v150 = vld [vmem:[%s4 + $0x2] sm:$0x1]
    %v154 = vperm.slane %v148, 0
    %v155 = vperm.slane %v149, 0
    %v156 = vperm.slane %v150, 0
    %vm160 = vcmask 523264
    %v162 = vsel %vm160, %v121, 0
    %164 = vmatpush.msra.mxu0 0.0
    %165 = vmatpush.msra.mxu0 0.0
    %166 = vmatpush.msra.mxu0 0.0
    %167 = vmatpush.msra.mxu0 0.0
    %168 = vmatpush.msra.mxu0 0.0
    %169 = vmatpush.msra.mxu0 0.0
    %170 = vmatpush.msra.mxu0 0.0
    %171 = vmatpush.msra.mxu0 0.0
    %172 = vmatpush.msra.mxu0 %v131
    %173 = vmatpush.msra.mxu0 %v130
    %174 = vmatpush.msra.mxu0 %v129
    %175 = vmatpush.msra.mxu0 %v128
    %176 = vmatpush.msra.mxu0 %v127
    %177 = vmatpush.msra.mxu0 %v126
    %178 = vmatpush.msra.mxu0 %v125
    %179 = vmatpush.msra.mxu0 %v124
    %180 = vmatmul.f32.gmra.mxu0 %v162
    %v181 = vpop.f32.mrf.mxu0
    %v182 = vadd.f32 %v154, %v181
    %183 = vdwg.mxu0
    %v185 = vsel %vm160, %v122, 0
    %187 = vmatpush.msra.mxu0 0.0
    %188 = vmatpush.msra.mxu0 0.0
    %189 = vmatpush.msra.mxu0 0.0
    %190 = vmatpush.msra.mxu0 0.0
    %191 = vmatpush.msra.mxu0 0.0
    %192 = vmatpush.msra.mxu0 0.0
    %193 = vmatpush.msra.mxu0 0.0
    %194 = vmatpush.msra.mxu0 0.0
    %195 = vmatpush.msra.mxu0 %v139
    %196 = vmatpush.msra.mxu0 %v138
    %197 = vmatpush.msra.mxu0 %v137
    %198 = vmatpush.msra.mxu0 %v136
    %199 = vmatpush.msra.mxu0 %v135
    %200 = vmatpush.msra.mxu0 %v134
    %201 = vmatpush.msra.mxu0 %v133
    %202 = vmatpush.msra.mxu0 %v132
    %203 = vmatmul.f32.gmra.mxu0 %v185
    %v204 = vpop.f32.mrf.mxu0
    %v205 = vadd.f32 %v155, %v204
    %206 = vdwg.mxu0
    %v208 = vsel %vm160, %v123, 0
    %210 = vmatpush.msra.mxu0 0.0
    %211 = vmatpush.msra.mxu0 0.0
    %212 = vmatpush.msra.mxu0 0.0
    %213 = vmatpush.msra.mxu0 0.0
    %214 = vmatpush.msra.mxu0 0.0
    %215 = vmatpush.msra.mxu0 0.0
    %216 = vmatpush.msra.mxu0 0.0
    %217 = vmatpush.msra.mxu0 0.0
    %218 = vmatpush.msra.mxu0 %v147
    %219 = vmatpush.msra.mxu0 %v146
    %220 = vmatpush.msra.mxu0 %v145
    %221 = vmatpush.msra.mxu0 %v144
    %222 = vmatpush.msra.mxu0 %v143
    %223 = vmatpush.msra.mxu0 %v142
    %224 = vmatpush.msra.mxu0 %v141
    %225 = vmatpush.msra.mxu0 %v140
    %226 = vmatmul.f32.gmra.mxu0 %v208
    %v227 = vpop.f32.mrf.mxu0
    %v228 = vadd.f32 %v156, %v227
    %229 = vdwg.mxu0
    %v230 = vmax.f32 %v182, 0.0
    %v231 = vmax.f32 %v205, 0.0
    %v232 = vmax.f32 %v228, 0.0
    %v233 = vld [vmem:[%s5] sm:$0xff]
    %v234 = vld [vmem:[%s5 + $0x8] sm:$0xff]
    %v235 = vld [vmem:[%s5 + $0x10] sm:$0xff]
    %v236 = vld [vmem:[%s5 + $0x18] sm:$0xff]
    %v237 = vld [vmem:[%s5 + $0x20] sm:$0xff]
    %v238 = vld [vmem:[%s5 + $0x28] sm:$0xff]
    %v239 = vld [vmem:[%s5 + $0x30] sm:$0xff]
    %v240 = vld [vmem:[%s5 + $0x38] sm:$0xff]
    %v241 = vld [vmem:[%s5 + $0x40] sm:$0xff]
    %v242 = vld [vmem:[%s5 + $0x48] sm:$0xff]
    %v243 = vld [vmem:[%s5 + $0x50] sm:$0xff]
    %v244 = vld [vmem:[%s5 + $0x58] sm:$0xff]
    %v245 = vld [vmem:[%s6] sm:$0x1]
    %v246 = vld [vmem:[%s6 + $0x1] sm:$0x1]
    %v247 = vld [vmem:[%s6 + $0x2] sm:$0x1]
    %v251 = vperm.slane %v245, 0
    %v252 = vperm.slane %v246, 0
    %v253 = vperm.slane %v247, 0
    %vm257 = vcmask 261120
    %v259 = vsel %vm257, %v230, 0
    %261 = vmatpush.msra.mxu0 0.0
    %262 = vmatpush.msra.mxu0 0.0
    %263 = vmatpush.msra.mxu0 0.0
    %264 = vmatpush.msra.mxu0 0.0
    %265 = vmatpush.msra.mxu0 0.0
    %266 = vmatpush.msra.mxu0 0.0
    %267 = vmatpush.msra.mxu0 0.0
    %268 = vmatpush.msra.mxu0 0.0
    %269 = vmatpush.msra.mxu0 0.0
    %270 = vmatpush.msra.mxu0 0.0
    %271 = vmatpush.msra.mxu0 0.0
    %272 = vmatpush.msra.mxu0 0.0
    %273 = vmatpush.msra.mxu0 %v236
    %274 = vmatpush.msra.mxu0 %v235
    %275 = vmatpush.msra.mxu0 %v234
    %276 = vmatpush.msra.mxu0 %v233
    %277 = vmatmul.f32.gmra.mxu0 %v259
    %v278 = vpop.f32.mrf.mxu0
    %v279 = vadd.f32 %v251, %v278
    %280 = vdwg.mxu0
    %v282 = vsel %vm257, %v231, 0
    %284 = vmatpush.msra.mxu0 0.0
    %285 = vmatpush.msra.mxu0 0.0
    %286 = vmatpush.msra.mxu0 0.0
    %287 = vmatpush.msra.mxu0 0.0
    %288 = vmatpush.msra.mxu0 0.0
    %289 = vmatpush.msra.mxu0 0.0
    %290 = vmatpush.msra.mxu0 0.0
    %291 = vmatpush.msra.mxu0 0.0
    %292 = vmatpush.msra.mxu0 0.0
    %293 = vmatpush.msra.mxu0 0.0
    %294 = vmatpush.msra.mxu0 0.0
    %295 = vmatpush.msra.mxu0 0.0
    %296 = vmatpush.msra.mxu0 %v240
    %297 = vmatpush.msra.mxu0 %v239
    %298 = vmatpush.msra.mxu0 %v238
    %299 = vmatpush.msra.mxu0 %v237
    %300 = vmatmul.f32.gmra.mxu0 %v282
    %v301 = vpop.f32.mrf.mxu0
    %v302 = vadd.f32 %v252, %v301
    %303 = vdwg.mxu0
    %v305 = vsel %vm257, %v232, 0
    %307 = vmatpush.msra.mxu0 0.0
    %308 = vmatpush.msra.mxu0 0.0
    %309 = vmatpush.msra.mxu0 0.0
    %310 = vmatpush.msra.mxu0 0.0
    %311 = vmatpush.msra.mxu0 0.0
    %312 = vmatpush.msra.mxu0 0.0
    %313 = vmatpush.msra.mxu0 0.0
    %314 = vmatpush.msra.mxu0 0.0
    %315 = vmatpush.msra.mxu0 0.0
    %316 = vmatpush.msra.mxu0 0.0
    %317 = vmatpush.msra.mxu0 0.0
    %318 = vmatpush.msra.mxu0 0.0
    %319 = vmatpush.msra.mxu0 %v244
    %320 = vmatpush.msra.mxu0 %v243
    %321 = vmatpush.msra.mxu0 %v242
    %322 = vmatpush.msra.mxu0 %v241
    %323 = vmatmul.f32.gmra.mxu0 %v305
    %v324 = vpop.f32.mrf.mxu0
    %v325 = vadd.f32 %v253, %v324
    %326 = vdwg.mxu0
    %v327 = vld [vmem:[%s7] sm:$0x1]
    %v328 = vld [vmem:[%s7 + $0x1] sm:$0x1]
    %v329 = vld [vmem:[%s7 + $0x2] sm:$0x1]
    %vm330 = vcmp.gt.f32.partialorder %v327, 0.0
    %vm331 = vcmp.gt.f32.partialorder %v328, 0.0
    %vm332 = vcmp.gt.f32.partialorder %v329, 0.0
    %v333 = vsel %vm330, 1, 0
    %v334 = vsel %vm331, 1, 0
    %v335 = vsel %vm332, 1, 0
    %v336 = vperm.slane %v333, 0
    %v337 = vperm.slane %v334, 0
    %v338 = vperm.slane %v335, 0
    %vm339 = vcmp.eq.s32.totalorder %v336, 1
    %vm340 = vcmp.eq.s32.totalorder %v337, 1
    %vm341 = vcmp.eq.s32.totalorder %v338, 1
    %v342 = vsel %vm339, -999.0, %v279
    %v343 = vsel %vm340, -999.0, %v302
    %v344 = vsel %vm341, -999.0, %v325
    %vm345 = vcmask 64512
    %346 = vst.msk [vmem:[#allocation2] sm:$0xff] %vm345, %v342
    %347 = vst.msk [vmem:[#allocation2 + $0x8] sm:$0xff] %vm345, %v343
    %348 = vst.msk [vmem:[#allocation2 + $0x10] sm:$0xff] %vm345, %v344
    // Predicated region
    $region34: #{tpu_custom_call.1} parent=1 // pred_check
      _
    $region35: #{tpu_custom_call.1} parent=1 // pred_check_branch
      %350 = sbr.rel (0) target = $region37
    $region36: #{tpu_custom_call.1} parent=1 // pred_region
      %352 = vsyncadd [#allocation3], 0
      %s353 = sshll.u32 [#allocation2], 4
      %s354 = int_to_ptr.vmem [resolvable:$true] %s353
      %s355 = sshll.u32 %s8, 4
      %s356 = int_to_ptr.hbm [resolvable:$true] %s355
      %361 = dma.vmem_to_hbm [thread:$0]  %s354, 384, %s356, [#allocation3], 128, 128, 8
    $region37: #{tpu_custom_call.1} parent=1 // pred_fallthru
      _
    // Predicated region
    $region38: #{tpu_custom_call.1} parent=1 // pred_check
      _
    $region39: #{tpu_custom_call.1} parent=1 // pred_check_branch
      %363 = sbr.rel (0) target = $region41
    $region40: #{tpu_custom_call.1} parent=1 // pred_region
      %365 = dma.done [#allocation3], 384
    $region41: #{tpu_custom_call.1} parent=1 // pred_fallthru
      _
    %366 = vsyncpa [#allocation3], 1

</llo_original>
